<compile_context>
chip_gen: v7x
topology: tpu7x:2x2x1
jax: 0.10.0
libtpu: 0.0.40
codegen_flags: <defaults>
</compile_context>

<pallas_src>
import functools

import jax
import jax.numpy as jnp
from jax.experimental import pallas as pl
from jax.experimental.pallas import tpu as pltpu


def _round_up(x, m):
    return (x + m - 1) // m * m


def _conv_stats_kernel(a_ref, w_ref, y_ref, sums_ref, sqs_ref, acc_ref, *,
                       wo, m_valid):
    """Implicit-GEMM k4s2 conv for one image + partial BN statistics.

    a_ref : (2, Rp, Kp) bf16    — dq-shifted, spatially flattened s2d slabs.
    w_ref : (4, Kp, Cout_p) bf16 — tap weights, tap = dp*2 + dq (VMEM resident).
    y_ref : (1, Mp, Cout_p) bf16 — conv output for this image.
    sums_ref / sqs_ref : (8, Cout_p) f32 — per-image partial sum / sum-of-sq.
    acc_ref : (Mp, Cout_p) f32 VMEM scratch (f32 accumulation, y stored bf16).
    """
    mp = acc_ref.shape[0]
    # Four taps of the space-to-depth'd 2x2 stride-1 conv:
    # output row m uses slab-dq row (m + dp*wo) — constant shifts, bf16 MXU dots.
    acc_ref[...] = jnp.dot(a_ref[0, 0:mp, :], w_ref[0],
                           preferred_element_type=jnp.float32)
    acc_ref[...] += jnp.dot(a_ref[1, 0:mp, :], w_ref[1],
                            preferred_element_type=jnp.float32)
    acc_ref[...] += jnp.dot(a_ref[0, wo:wo + mp, :], w_ref[2],
                            preferred_element_type=jnp.float32)
    acc_ref[...] += jnp.dot(a_ref[1, wo:wo + mp, :], w_ref[3],
                            preferred_element_type=jnp.float32)

    y = acc_ref[...]
    if m_valid != mp:
        # Zero padded output rows so they cannot pollute the statistics.
        rows = jax.lax.broadcasted_iota(jnp.int32, y.shape, 0)
        y = jnp.where(rows < m_valid, y, 0.0)

    y_ref[0] = y.astype(y_ref.dtype)
    # Training-mode BatchNorm partial statistics (one pass, f32).
    ssum = jnp.sum(y, axis=0, keepdims=True)
    ssq = jnp.sum(y * y, axis=0, keepdims=True)
    sums_ref[...] = jnp.broadcast_to(ssum, sums_ref.shape)
    sqs_ref[...] = jnp.broadcast_to(ssq, sqs_ref.shape)


def block_forward(x_nchw, weight_oihw, gamma, beta, *, act="relu",
                  use_dropout=False, eps=1e-5):
    """Forward of Block(down=True, act=act): conv k4 s2 p1 reflect -> BN -> act."""
    # TODO(synk): down=False path (ConvTranspose2d) not implemented.
    # TODO(synk): use_dropout=True (training-mode Dropout p=0.5) not implemented;
    # the default Block(use_dropout=False) is an identity pass-through here.
    # TODO(synk): BatchNorm running_mean/running_var state updates not produced.
    N, Cin, H, W = x_nchw.shape
    Cout, _, KH, KW = weight_oihw.shape
    assert (KH, KW) == (4, 4) and H % 2 == 0 and W % 2 == 0

    Ho, Wo = H // 2, W // 2
    m_img = Ho * Wo                        # output pixels per image
    mp = _round_up(m_img, 8)
    kp = _round_up(4 * Cin, 128)           # s2d channels, lane-padded
    cout_p = _round_up(Cout, 128)
    rp = _round_up(mp + Wo, 8)             # slab rows (output rows + dp halo)

    # ---- host glue (bf16 throughout; ~1x input size, no im2col blow-up) ----
    x = jnp.transpose(x_nchw, (0, 2, 3, 1)).astype(jnp.bfloat16)        # NHWC
    x_pad = jnp.pad(x, ((0, 0), (1, 1), (1, 1), (0, 0)), mode="reflect")
    hp2, wp2 = Ho + 1, Wo + 1
    # Space-to-depth by 2: s2d channel index = di*2*Cin + dj*Cin + ci.
    x_s2d = x_pad.reshape(N, hp2, 2, wp2, 2, Cin)
    x_s2d = x_s2d.transpose(0, 1, 3, 2, 4, 5).reshape(N, hp2, wp2, 4 * Cin)
    # Two column-shifted slabs (dq = 0, 1), spatially flattened: the dp row
    # shift becomes the constant offset dp*Wo inside the kernel.
    a0 = x_s2d[:, :, 0:Wo, :].reshape(N, hp2 * Wo, 4 * Cin)
    a1 = x_s2d[:, :, 1:Wo + 1, :].reshape(N, hp2 * Wo, 4 * Cin)
    a = jnp.stack([a0, a1], axis=1)                                     # (N,2,R,4Cin)
    a = jnp.pad(a, ((0, 0), (0, 0), (0, rp - hp2 * Wo), (0, kp - 4 * Cin)))
    a = a.reshape(N * 2, rp, kp)

    # Tap weights: w_taps[dp*2+dq, di*2*Cin+dj*Cin+ci, co] = w[co, ci, 2dp+di, 2dq+dj]
    w_t = jnp.transpose(weight_oihw, (2, 3, 1, 0)).astype(jnp.bfloat16)  # (4,4,Cin,Cout)
    w_taps = w_t.reshape(2, 2, 2, 2, Cin, Cout).transpose(0, 2, 1, 3, 4, 5)
    w_taps = w_taps.reshape(4, 4 * Cin, Cout)
    w_taps = jnp.pad(w_taps, ((0, 0), (0, kp - 4 * Cin), (0, cout_p - Cout)))

    # ---- Pallas: per-image implicit-GEMM conv + partial BN statistics ----
    y, sums, sqs = pl.pallas_call(
        functools.partial(_conv_stats_kernel, wo=Wo, m_valid=m_img),
        out_shape=(
            jax.ShapeDtypeStruct((N, mp, cout_p), jnp.bfloat16),
            jax.ShapeDtypeStruct((N * 8, cout_p), jnp.float32),
            jax.ShapeDtypeStruct((N * 8, cout_p), jnp.float32),
        ),
        grid=(N,),
        in_specs=[
            pl.BlockSpec((2, rp, kp), lambda n: (n, 0, 0)),
            pl.BlockSpec((4, kp, cout_p), lambda n: (0, 0, 0)),   # VMEM-resident
        ],
        out_specs=(
            pl.BlockSpec((1, mp, cout_p), lambda n: (n, 0, 0)),
            pl.BlockSpec((8, cout_p), lambda n: (n, 0)),
            pl.BlockSpec((8, cout_p), lambda n: (n, 0)),
        ),
        scratch_shapes=[pltpu.VMEM((mp, cout_p), jnp.float32)],
        compiler_params=pltpu.CompilerParams(
            dimension_semantics=("parallel",),
            vmem_limit_bytes=64 * 1024 * 1024),
    )(a, w_taps)

    # ---- tiny O(Cout) stats reduction + BN scale/shift ----
    count = N * m_img
    total_sum = jnp.sum(sums.reshape(N, 8, cout_p)[:, 0, :], axis=0)
    total_sq = jnp.sum(sqs.reshape(N, 8, cout_p)[:, 0, :], axis=0)
    mean = total_sum / count
    # TODO(synk): single-pass E[y^2]-mean^2 can cancel when |mean| >> std at
    # very large counts; acceptable within the bf16 / 3e-2 accuracy budget here.
    var = jnp.maximum(total_sq / count - mean * mean, 0.0)
    inv = jax.lax.rsqrt(var + eps)
    scale = jnp.pad(gamma.astype(jnp.float32), (0, cout_p - Cout)) * inv
    shift = jnp.pad(beta.astype(jnp.float32), (0, cout_p - Cout)) - mean * scale

    # ---- fused XLA epilogue: normalise + activation + un-pad + NHWC->NCHW ----
    z = y.astype(jnp.float32) * scale[None, None, :] + shift[None, None, :]
    z = jnp.maximum(z, 0.0) if act == "relu" else jnp.where(z >= 0.0, z, 0.2 * z)
    out = z[:, :m_img, :Cout].reshape(N, Ho, Wo, Cout)
    return jnp.transpose(out, (0, 3, 1, 2))                    # back to NCHW


def reference_forward(x_nchw, weight_oihw, gamma, beta, act="relu"):
    """Pure-JAX f32 reference matching the PyTorch Block forward (training BN)."""
    x_pad = jnp.pad(x_nchw, ((0, 0), (0, 0), (1, 1), (1, 1)), mode="reflect")
    y = jax.lax.conv_general_dilated(
        x_pad.astype(jnp.float32), weight_oihw.astype(jnp.float32),
        window_strides=(2, 2), padding="VALID",
        dimension_numbers=("NCHW", "OIHW", "NCHW"))
    mean = jnp.mean(y, axis=(0, 2, 3), keepdims=True)
    var = jnp.var(y, axis=(0, 2, 3), keepdims=True)
    y = (y - mean) / jnp.sqrt(var + 1e-5)
    y = y * gamma.reshape(1, -1, 1, 1) + beta.reshape(1, -1, 1, 1)
    return jnp.maximum(y, 0.0) if act == "relu" else jnp.where(y >= 0.0, y, 0.2 * y)


if __name__ == "__main__":
    key = jax.random.PRNGKey(0)
    k_x, k_w, k_g, k_b = jax.random.split(key, 4)

    N, Cin, H, W = 2, 4, 16, 16
    Cout = 8

    x = jax.random.normal(k_x, (N, Cin, H, W), dtype=jnp.float32)
    weight = 0.1 * jax.random.normal(k_w, (Cout, Cin, 4, 4), dtype=jnp.float32)
    gamma = 1.0 + 0.1 * jax.random.normal(k_g, (Cout,), dtype=jnp.float32)
    beta = 0.1 * jax.random.normal(k_b, (Cout,), dtype=jnp.float32)

    out = block_forward(x, weight, gamma, beta, act="relu", use_dropout=False)
    out = jax.block_until_ready(out)

    ref = jax.block_until_ready(reference_forward(x, weight, gamma, beta, act="relu"))
    assert out.shape == (N, Cout, H // 2, W // 2), out.shape
    # bf16 matmul inputs / bf16 y (f32 accumulation) -> loosened tolerance.
    assert jnp.allclose(out, ref, atol=3e-2, rtol=3e-2), \
        float(jnp.max(jnp.abs(out - ref)))

    print("KERNEL_OK")
</pallas_src>

<mosaic_0001>
module attributes {stable_mosaic.version = 11 : i64} {
  func.func @_conv_stats_kernel(%arg0: i32, %arg1: memref<2x72x128xbf16, #tpu.memory_space<vmem>>, %arg2: memref<4x128x128xbf16, #tpu.memory_space<vmem>>, %arg3: memref<1x64x128xbf16, #tpu.memory_space<vmem>>, %arg4: memref<8x128xf32, #tpu.memory_space<vmem>>, %arg5: memref<8x128xf32, #tpu.memory_space<vmem>>, %arg6: memref<64x128xf32, #tpu.memory_space<vmem>>) attributes {dimension_semantics = [#tpu.dimension_semantics<parallel>], iteration_bounds = array<i64: 2>, scalar_prefetch = 0 : i64, scratch_operands = 1 : i64, tpu.core_type = #tpu.core_type<tc>, window_params = [{transform_indices = @transform_0, window_bounds = array<i64: 2, 72, 128>}, {pipeline_mode = #tpu.pipeline_mode<synchronous>, transform_indices = @transform_1, window_bounds = array<i64: 4, 128, 128>}, {transform_indices = @transform_2, window_bounds = array<i64: 1, 64, 128>}, {transform_indices = @transform_3, window_bounds = array<i64: 8, 128>}, {transform_indices = @transform_4, window_bounds = array<i64: 8, 128>}]} {
    %c0 = arith.constant 0 : index
    %c0_0 = arith.constant 0 : index
    %c0_1 = arith.constant 0 : index
    %0 = vector.load %arg1[%c0, %c0_0, %c0_1] : memref<2x72x128xbf16, #tpu.memory_space<vmem>>, vector<1x64x128xbf16>
    %1 = vector.shape_cast %0 : vector<1x64x128xbf16> to vector<64x128xbf16>
    %c0_2 = arith.constant 0 : index
    %c0_3 = arith.constant 0 : index
    %c0_4 = arith.constant 0 : index
    %2 = vector.load %arg2[%c0_2, %c0_3, %c0_4] : memref<4x128x128xbf16, #tpu.memory_space<vmem>>, vector<1x128x128xbf16>
    %3 = vector.shape_cast %2 : vector<1x128x128xbf16> to vector<128x128xbf16>
    %cst = arith.constant dense<0.000000e+00> : vector<64x128xf32>
    %4 = tpu.matmul %1, %3, %cst {dimension_numbers = #tpu.dot_dimension_numbers<[1], [0], [0], [1], [0, 0, 1, 1], [], []>} : vector<64x128xbf16>, vector<128x128xbf16>, vector<64x128xf32> -> vector<64x128xf32>
    %c0_5 = arith.constant 0 : index
    %c0_6 = arith.constant 0 : index
    %5 = vector.load %arg6[%c0_5, %c0_6] : memref<64x128xf32, #tpu.memory_space<vmem>>, vector<64x128xf32>
    tpu.vector_store %arg6[%c0_5, %c0_6], %4 {strides = array<i32>} : memref<64x128xf32, #tpu.memory_space<vmem>>, vector<64x128xf32>,
    %c0_7 = arith.constant 0 : index
    %c0_8 = arith.constant 0 : index
    %6 = vector.load %arg6[%c0_7, %c0_8] : memref<64x128xf32, #tpu.memory_space<vmem>>, vector<64x128xf32>
    %c1 = arith.constant 1 : index
    %c0_9 = arith.constant 0 : index
    %c0_10 = arith.constant 0 : index
    %7 = vector.load %arg1[%c1, %c0_9, %c0_10] : memref<2x72x128xbf16, #tpu.memory_space<vmem>>, vector<1x64x128xbf16>
    %8 = vector.shape_cast %7 : vector<1x64x128xbf16> to vector<64x128xbf16>
    %c1_11 = arith.constant 1 : index
    %c0_12 = arith.constant 0 : index
    %c0_13 = arith.constant 0 : index
    %9 = vector.load %arg2[%c1_11, %c0_12, %c0_13] : memref<4x128x128xbf16, #tpu.memory_space<vmem>>, vector<1x128x128xbf16>
    %10 = vector.shape_cast %9 : vector<1x128x128xbf16> to vector<128x128xbf16>
    %cst_14 = arith.constant dense<0.000000e+00> : vector<64x128xf32>
    %11 = tpu.matmul %8, %10, %cst_14 {dimension_numbers = #tpu.dot_dimension_numbers<[1], [0], [0], [1], [0, 0, 1, 1], [], []>} : vector<64x128xbf16>, vector<128x128xbf16>, vector<64x128xf32> -> vector<64x128xf32>
    %12 = arith.addf %6, %11 : vector<64x128xf32>
    %c0_15 = arith.constant 0 : index
    %c0_16 = arith.constant 0 : index
    %13 = vector.load %arg6[%c0_15, %c0_16] : memref<64x128xf32, #tpu.memory_space<vmem>>, vector<64x128xf32>
    tpu.vector_store %arg6[%c0_15, %c0_16], %12 {strides = array<i32>} : memref<64x128xf32, #tpu.memory_space<vmem>>, vector<64x128xf32>,
    %c0_17 = arith.constant 0 : index
    %c0_18 = arith.constant 0 : index
    %14 = vector.load %arg6[%c0_17, %c0_18] : memref<64x128xf32, #tpu.memory_space<vmem>>, vector<64x128xf32>
    %c0_19 = arith.constant 0 : index
    %c8 = arith.constant 8 : index
    %c0_20 = arith.constant 0 : index
    %15 = vector.load %arg1[%c0_19, %c8, %c0_20] : memref<2x72x128xbf16, #tpu.memory_space<vmem>>, vector<1x64x128xbf16>
    %16 = vector.shape_cast %15 : vector<1x64x128xbf16> to vector<64x128xbf16>
    %c2 = arith.constant 2 : index
    %c0_21 = arith.constant 0 : index
    %c0_22 = arith.constant 0 : index
    %17 = vector.load %arg2[%c2, %c0_21, %c0_22] : memref<4x128x128xbf16, #tpu.memory_space<vmem>>, vector<1x128x128xbf16>
    %18 = vector.shape_cast %17 : vector<1x128x128xbf16> to vector<128x128xbf16>
    %cst_23 = arith.constant dense<0.000000e+00> : vector<64x128xf32>
    %19 = tpu.matmul %16, %18, %cst_23 {dimension_numbers = #tpu.dot_dimension_numbers<[1], [0], [0], [1], [0, 0, 1, 1], [], []>} : vector<64x128xbf16>, vector<128x128xbf16>, vector<64x128xf32> -> vector<64x128xf32>
    %20 = arith.addf %14, %19 : vector<64x128xf32>
    %c0_24 = arith.constant 0 : index
    %c0_25 = arith.constant 0 : index
    %21 = vector.load %arg6[%c0_24, %c0_25] : memref<64x128xf32, #tpu.memory_space<vmem>>, vector<64x128xf32>
    tpu.vector_store %arg6[%c0_24, %c0_25], %20 {strides = array<i32>} : memref<64x128xf32, #tpu.memory_space<vmem>>, vector<64x128xf32>,
    %c0_26 = arith.constant 0 : index
    %c0_27 = arith.constant 0 : index
    %22 = vector.load %arg6[%c0_26, %c0_27] : memref<64x128xf32, #tpu.memory_space<vmem>>, vector<64x128xf32>
    %c1_28 = arith.constant 1 : index
    %c8_29 = arith.constant 8 : index
    %c0_30 = arith.constant 0 : index
    %23 = vector.load %arg1[%c1_28, %c8_29, %c0_30] : memref<2x72x128xbf16, #tpu.memory_space<vmem>>, vector<1x64x128xbf16>
    %24 = vector.shape_cast %23 : vector<1x64x128xbf16> to vector<64x128xbf16>
    %c3 = arith.constant 3 : index
    %c0_31 = arith.constant 0 : index
    %c0_32 = arith.constant 0 : index
    %25 = vector.load %arg2[%c3, %c0_31, %c0_32] : memref<4x128x128xbf16, #tpu.memory_space<vmem>>, vector<1x128x128xbf16>
    %26 = vector.shape_cast %25 : vector<1x128x128xbf16> to vector<128x128xbf16>
    %cst_33 = arith.constant dense<0.000000e+00> : vector<64x128xf32>
    %27 = tpu.matmul %24, %26, %cst_33 {dimension_numbers = #tpu.dot_dimension_numbers<[1], [0], [0], [1], [0, 0, 1, 1], [], []>} : vector<64x128xbf16>, vector<128x128xbf16>, vector<64x128xf32> -> vector<64x128xf32>
    %28 = arith.addf %22, %27 : vector<64x128xf32>
    %c0_34 = arith.constant 0 : index
    %c0_35 = arith.constant 0 : index
    %29 = vector.load %arg6[%c0_34, %c0_35] : memref<64x128xf32, #tpu.memory_space<vmem>>, vector<64x128xf32>
    tpu.vector_store %arg6[%c0_34, %c0_35], %28 {strides = array<i32>} : memref<64x128xf32, #tpu.memory_space<vmem>>, vector<64x128xf32>,
    %c0_36 = arith.constant 0 : index
    %c0_37 = arith.constant 0 : index
    %30 = vector.load %arg6[%c0_36, %c0_37] : memref<64x128xf32, #tpu.memory_space<vmem>>, vector<64x128xf32>
    %31 = arith.truncf %30 : vector<64x128xf32> to vector<64x128xbf16>
    %c0_38 = arith.constant 0 : index
    %c0_39 = arith.constant 0 : index
    %c0_40 = arith.constant 0 : index
    %32 = vector.load %arg3[%c0_38, %c0_39, %c0_40] : memref<1x64x128xbf16, #tpu.memory_space<vmem>>, vector<1x64x128xbf16>
    %33 = vector.shape_cast %32 : vector<1x64x128xbf16> to vector<64x128xbf16>
    %34 = vector.shape_cast %31 : vector<64x128xbf16> to vector<1x64x128xbf16>
    tpu.vector_store %arg3[%c0_38, %c0_39, %c0_40], %34 {strides = array<i32>} : memref<1x64x128xbf16, #tpu.memory_space<vmem>>, vector<1x64x128xbf16>,
    %cst_41 = arith.constant dense<0.000000e+00> : vector<128xf32>
    %35 = vector.multi_reduction <add>, %30, %cst_41 [0] : vector<64x128xf32> to vector<128xf32>
    %36 = vector.shape_cast %35 : vector<128xf32> to vector<1x128xf32>
    %37 = arith.mulf %30, %30 : vector<64x128xf32>
    %cst_42 = arith.constant dense<0.000000e+00> : vector<128xf32>
    %38 = vector.multi_reduction <add>, %37, %cst_42 [0] : vector<64x128xf32> to vector<128xf32>
    %39 = vector.shape_cast %38 : vector<128xf32> to vector<1x128xf32>
    %40 = vector.shape_cast %36 : vector<1x128xf32> to vector<1x128xf32>
    %41 = vector.broadcast %40 : vector<1x128xf32> to vector<8x128xf32>
    %c0_43 = arith.constant 0 : index
    %c0_44 = arith.constant 0 : index
    %42 = vector.load %arg4[%c0_43, %c0_44] : memref<8x128xf32, #tpu.memory_space<vmem>>, vector<8x128xf32>
    tpu.vector_store %arg4[%c0_43, %c0_44], %41 {strides = array<i32>} : memref<8x128xf32, #tpu.memory_space<vmem>>, vector<8x128xf32>,
    %43 = vector.shape_cast %39 : vector<1x128xf32> to vector<1x128xf32>
    %44 = vector.broadcast %43 : vector<1x128xf32> to vector<8x128xf32>
    %c0_45 = arith.constant 0 : index
    %c0_46 = arith.constant 0 : index
    %45 = vector.load %arg5[%c0_45, %c0_46] : memref<8x128xf32, #tpu.memory_space<vmem>>, vector<8x128xf32>
    tpu.vector_store %arg5[%c0_45, %c0_46], %44 {strides = array<i32>} : memref<8x128xf32, #tpu.memory_space<vmem>>, vector<8x128xf32>,
    return
  }
  func.func @transform_0(%arg0: i32) -> (i32, i32, i32) {
    %c0_i32 = arith.constant 0 : i32
    %c0_i32_0 = arith.constant 0 : i32
    %c0_i32_1 = arith.constant 0 : i32
    return %arg0, %c0_i32, %c0_i32_0 : i32, i32, i32
  }
  func.func @transform_1(%arg0: i32) -> (i32, i32, i32) {
    %c0_i32 = arith.constant 0 : i32
    %c0_i32_0 = arith.constant 0 : i32
    %c0_i32_1 = arith.constant 0 : i32
    %c0_i32_2 = arith.constant 0 : i32
    return %c0_i32, %c0_i32_0, %c0_i32_1 : i32, i32, i32
  }
  func.func @transform_2(%arg0: i32) -> (i32, i32, i32) {
    %c0_i32 = arith.constant 0 : i32
    %c0_i32_0 = arith.constant 0 : i32
    %c0_i32_1 = arith.constant 0 : i32
    return %arg0, %c0_i32, %c0_i32_0 : i32, i32, i32
  }
  func.func @transform_3(%arg0: i32) -> (i32, i32) {
    %c0_i32 = arith.constant 0 : i32
    %c0_i32_0 = arith.constant 0 : i32
    return %arg0, %c0_i32 : i32, i32
  }
  func.func @transform_4(%arg0: i32) -> (i32, i32) {
    %c0_i32 = arith.constant 0 : i32
    %c0_i32_0 = arith.constant 0 : i32
    return %arg0, %c0_i32 : i32, i32
  }
}

</mosaic_0001>

<llo_original>
// kernel: tpu_custom_call.1
$region0: #{tpu_custom_call.1}
  #allocation0 [shape = 'u32[]', space=smem, size = 0x4, offset = 0x4, fixed_abs, tag = 'smem constant byte address 0x4 - core index']
  #allocation1 [shape = 'u32[144,128]{1,0:T(1,128)}', space=vmem, size = 0x12000, scoped, tag = 'internal scratch']
  #allocation2 [shape = 'f32[64,128]{1,0:T(8,128)}', space=vmem, size = 0x8000, scoped, tag = 'scratch operand']
  %s0 = inlined_call_operand.hbm [shape: bf16[4,72,128], index: 0, kind: input, shape index: {}]
  %s1 = inlined_call_operand.hbm [shape: bf16[4,128,128], index: 1, kind: input, shape index: {}]
  %s2 = inlined_call_operand.hbm [shape: bf16[2,64,128], index: 2, kind: output, shape index: {0}]
  %s3 = inlined_call_operand.hbm [shape: f32[16,128], index: 3, kind: output, shape index: {1}]
  %s4 = inlined_call_operand.hbm [shape: f32[16,128], index: 4, kind: output, shape index: {2}]
  %5 = xla_tuple %s2, %s3, %s4
  %s6 = sld [smem:[#allocation0]]
  $region65: #{tpu_custom_call.1} parent=0
    _
  %s8 = ssub.s32 1, %s6
  %s9 = scalar_select 0, %s8, %s6
  $region1: #{tpu_custom_call.1} parent=0
    #allocation3 [shape = 'u8[73728]{0}', space=vmem, size = 0x12000, scoped, tag = 'input window, operand 0']
    #allocation4 [shape = 's32[2]{0}', space=sflag, size = 0x8, scoped, tag = 'scoped memory for tpu_custom_call.1']
    #allocation5 [shape = 's32[2]{0}', space=sflag, size = 0x8, scoped, tag = 'scoped memory for tpu_custom_call.1']
    #allocation6 [shape = 'u8[131072]{0}', space=vmem, size = 0x20000, scoped, tag = 'input window, operand 1, single buffered']
    #allocation7 [shape = 's32[1]{0}', space=sflag, size = 0x4, scoped, tag = 'scoped memory for tpu_custom_call.1']
    #allocation8 [shape = 'u8[32768]{0}', space=vmem, size = 0x8000, scoped, tag = 'output window, operand 0']
    #allocation9 [shape = 'u8[8192]{0}', space=vmem, size = 0x2000, scoped, tag = 'output window, operand 1']
    #allocation10 [shape = 's32[2]{0}', space=sflag, size = 0x8, scoped, tag = 'scoped memory for tpu_custom_call.1']
    #allocation11 [shape = 'u8[8192]{0}', space=vmem, size = 0x2000, scoped, tag = 'output window, operand 2']
    %10 = vsyncpa [#allocation4], 0
    %s11 = scalar_lea.sflag [#allocation4], 1
    %12 = vsyncpa %s11, 0
    %13 = vsyncpa [#allocation7], 0
    %14 = vsyncpa [#allocation5], 0
    %s15 = scalar_lea.sflag [#allocation5], 1
    %16 = vsyncpa %s15, 0
    %17 = vsyncpa [#allocation10], 0
    %s18 = scalar_lea.sflag [#allocation10], 1
    %19 = vsyncpa %s18, 0
    loop: start=0, step=1, limit=4
    $region2: #{tpu_custom_call.1} parent=1 // loop_pre_header
      _
    $region3: #{tpu_custom_call.1} parent=1 // loop_header
      %s21 = sphi 0, %s25
      %p22 = scmp.ge.s32.totalorder %s21, 4
      %s31 = sphi 0, %s33
      %s34 = sphi 0, %s31
      %s35 = sphi 0, %s34
      %s51 = sphi 0, %s35
      %s55 = sphi 0, %s55
      %s57 = sphi 0, %s55
      %s58 = sphi 0, %s57
      %s72 = sphi 0, %s58
      %s78 = sphi 0, %s80
      %s81 = sphi 0, %s78
      %s82 = sphi 0, %s81
      %s98 = sphi 0, %s82
      %s104 = sphi 0, %s106
      %s107 = sphi 0, %s104
      %s108 = sphi 0, %s107
      %s124 = sphi 0, %s108
      %s130 = sphi 0, %s132
      %s133 = sphi 0, %s130
      %s134 = sphi 0, %s133
      %s150 = sphi 0, %s134
    $region4: #{tpu_custom_call.1} parent=1 // loop_header_branch
      %24 = sbr.rel (%p22) target = $region8
    $region5: #{tpu_custom_call.1} parent=1 // loop_body
      %s26 = ssub.s32 %s21, 1
      %s27 = ssub.s32 %s21, 2
      %s28 = sadd.s32 %s21, 1
      %s29 = ssub.s32 %s21, %s28
      %p30 = scmp.eq.s32.totalorder %s29, 0
      %s32 = sadd.s32 %s31, 1
      %s33 = scalar_select %p30, %s31, %s32
      %p36 = pneg %p30
      %p37 = scmp.eq.s32.totalorder %s21, 1
      %p38 = por %p36, %p37
      %p39 = scmp.ne.s32.totalorder %s31, %s34
      %p40 = scmp.eq.s32.totalorder %s21, 0
      %p41 = por %p39, %p40
      %p42 = scmp.ne.s32.totalorder %s31, %s34
      %p43 = scmp.eq.s32.totalorder %s26, 1
      %p44 = por %p42, %p43
      %p45 = scmp.ne.s32.totalorder %s34, %s35
      %p46 = scmp.eq.s32.totalorder %s26, 0
      %p47 = por %p45, %p46
      %p48 = scmp.ne.s32.totalorder %s34, %s35
      %p49 = scmp.eq.s32.totalorder %s27, 1
      %p50 = por %p48, %p49
      %p52 = scmp.ne.s32.totalorder %s35, %s51
      %p53 = scmp.eq.s32.totalorder %s27, 0
      %p54 = por %p52, %p53
      %s56 = sadd.s32 %s55, 1
      %p59 = scmp.eq.s32.totalorder %s21, 1
      %p60 = scmp.ne.s32.totalorder %s55, %s57
      %p61 = scmp.eq.s32.totalorder %s21, 0
      %p62 = por %p60, %p61
      %p63 = scmp.ne.s32.totalorder %s55, %s57
      %p64 = scmp.eq.s32.totalorder %s26, 1
      %p65 = por %p63, %p64
      %p66 = scmp.ne.s32.totalorder %s57, %s58
      %p67 = scmp.eq.s32.totalorder %s26, 0
      %p68 = por %p66, %p67
      %p69 = scmp.ne.s32.totalorder %s57, %s58
      %p70 = scmp.eq.s32.totalorder %s27, 1
      %p71 = por %p69, %p70
      %p73 = scmp.ne.s32.totalorder %s58, %s72
      %p74 = scmp.eq.s32.totalorder %s27, 0
      %p75 = por %p73, %p74
      %s76 = ssub.s32 %s21, %s28
      %p77 = scmp.eq.s32.totalorder %s76, 0
      %s79 = sadd.s32 %s78, 1
      %s80 = scalar_select %p77, %s78, %s79
      %p83 = pneg %p77
      %p84 = scmp.eq.s32.totalorder %s21, 1
      %p85 = por %p83, %p84
      %p86 = scmp.ne.s32.totalorder %s78, %s81
      %p87 = scmp.eq.s32.totalorder %s21, 0
      %p88 = por %p86, %p87
      %p89 = scmp.ne.s32.totalorder %s78, %s81
      %p90 = scmp.eq.s32.totalorder %s26, 1
      %p91 = por %p89, %p90
      %p92 = scmp.ne.s32.totalorder %s81, %s82
      %p93 = scmp.eq.s32.totalorder %s26, 0
      %p94 = por %p92, %p93
      %p95 = scmp.ne.s32.totalorder %s81, %s82
      %p96 = scmp.eq.s32.totalorder %s27, 1
      %p97 = por %p95, %p96
      %p99 = scmp.ne.s32.totalorder %s82, %s98
      %p100 = scmp.eq.s32.totalorder %s27, 0
      %p101 = por %p99, %p100
      %s102 = ssub.s32 %s21, %s28
      %p103 = scmp.eq.s32.totalorder %s102, 0
      %s105 = sadd.s32 %s104, 1
      %s106 = scalar_select %p103, %s104, %s105
      %p109 = pneg %p103
      %p110 = scmp.eq.s32.totalorder %s21, 1
      %p111 = por %p109, %p110
      %p112 = scmp.ne.s32.totalorder %s104, %s107
      %p113 = scmp.eq.s32.totalorder %s21, 0
      %p114 = por %p112, %p113
      %p115 = scmp.ne.s32.totalorder %s104, %s107
      %p116 = scmp.eq.s32.totalorder %s26, 1
      %p117 = por %p115, %p116
      %p118 = scmp.ne.s32.totalorder %s107, %s108
      %p119 = scmp.eq.s32.totalorder %s26, 0
      %p120 = por %p118, %p119
      %p121 = scmp.ne.s32.totalorder %s107, %s108
      %p122 = scmp.eq.s32.totalorder %s27, 1
      %p123 = por %p121, %p122
      %p125 = scmp.ne.s32.totalorder %s108, %s124
      %p126 = scmp.eq.s32.totalorder %s27, 0
      %p127 = por %p125, %p126
      %s128 = ssub.s32 %s21, %s28
      %p129 = scmp.eq.s32.totalorder %s128, 0
      %s131 = sadd.s32 %s130, 1
      %s132 = scalar_select %p129, %s130, %s131
      %p135 = pneg %p129
      %p136 = scmp.eq.s32.totalorder %s21, 1
      %p137 = por %p135, %p136
      %p138 = scmp.ne.s32.totalorder %s130, %s133
      %p139 = scmp.eq.s32.totalorder %s21, 0
      %p140 = por %p138, %p139
      %p141 = scmp.ne.s32.totalorder %s130, %s133
      %p142 = scmp.eq.s32.totalorder %s26, 1
      %p143 = por %p141, %p142
      %p144 = scmp.ne.s32.totalorder %s133, %s134
      %p145 = scmp.eq.s32.totalorder %s26, 0
      %p146 = por %p144, %p145
      %p147 = scmp.ne.s32.totalorder %s133, %s134
      %p148 = scmp.eq.s32.totalorder %s27, 1
      %p149 = por %p147, %p148
      %p151 = scmp.ne.s32.totalorder %s134, %s150
      %p152 = scmp.eq.s32.totalorder %s27, 0
      %p153 = por %p151, %p152
      %p154 = scmp.le.s32.totalorder 1, %s21
      %p155 = scmp.lt.s32.totalorder %s21, 3
      %p156 = pnand %p154, %p155
      %p157 = pneg %p156
      // Predicated region
      $region9: #{tpu_custom_call.1} parent=5 // pred_check
        _
      $region10: #{tpu_custom_call.1} parent=5 // pred_check_branch
        %159 = sbr.rel (%p156) target = $region12
      $region11: #{tpu_custom_call.1} parent=5 // pred_region
        %s160 = ssub.s32 %s21, 1
        // Predicated region
        $region13: #{tpu_custom_call.1} parent=11 // pred_check
          %p161 = pneg %p68
        $region14: #{tpu_custom_call.1} parent=11 // pred_check_branch
          %163 = sbr.rel (%p161) target = $region16
        $region15: #{tpu_custom_call.1} parent=11 // pred_region
          %s165 = ssub.s32 4096, 4096
          %166 = vsyncadd [#allocation7], %s165
          %s167 = sshll.u32 [#allocation6], 4
          %s168 = int_to_ptr.vmem [resolvable:$true] %s167
          %173 = dma.hbm_to_vmem [thread:$0]  %s1, 4096, %s168, [#allocation7], 64, 64, 4
        $region16: #{tpu_custom_call.1} parent=11 // pred_fallthru
          _
      $region12: #{tpu_custom_call.1} parent=5 // pred_fallthru
        _
      %p174 = scmp.lt.s32.totalorder %s21, 2
      // Predicated region
      $region17: #{tpu_custom_call.1} parent=5 // pred_check
        %p175 = pneg %p174
      $region18: #{tpu_custom_call.1} parent=5 // pred_check_branch
        %177 = sbr.rel (%p175) target = $region20
      $region19: #{tpu_custom_call.1} parent=5 // pred_region
        // Predicated region
        $region21: #{tpu_custom_call.1} parent=19 // pred_check
          %p178 = pneg %p41
        $region22: #{tpu_custom_call.1} parent=19 // pred_check_branch
          %180 = sbr.rel (%p178) target = $region24
        $region23: #{tpu_custom_call.1} parent=19 // pred_region
          %s181 = sand.u32 %s31, 1
          %s182 = scalar_lea.sflag [#allocation4], %s181
          %s183 = sand.u32 %s31, 1
          %s184 = smul.addr %s183, 72
          %s185 = scalar_lea.vmem [#allocation3], %s184
          %s186 = smul.u32 2, %s21
          %s188 = ssub.s32 1152, 1152
          %189 = vsyncadd %s182, %s188
          %s190 = smul.addr %s186, 9
          %s191 = smul.addr %s190, 64
          %s192 = scalar_lea.hbm %s0, %s191
          %s193 = sshll.u32 %s185, 4
          %s194 = int_to_ptr.vmem [resolvable:$true] %s193
          %199 = dma.hbm_to_vmem [thread:$0]  %s192, 1152, %s194, %s182, 64, 64, 4
        $region24: #{tpu_custom_call.1} parent=19 // pred_fallthru
          _
      $region20: #{tpu_custom_call.1} parent=5 // pred_fallthru
        _
      %p200 = scmp.le.s32.totalorder 1, %s21
      %p201 = scmp.lt.s32.totalorder %s21, 3
      %p202 = pnand %p200, %p201
      %p203 = pneg %p202
      // Predicated region
      $region25: #{tpu_custom_call.1} parent=5 // pred_check
        _
      $region26: #{tpu_custom_call.1} parent=5 // pred_check_branch
        %205 = sbr.rel (%p202) target = $region28
      $region27: #{tpu_custom_call.1} parent=5 // pred_region
        %s206 = ssub.s32 %s21, 1
        %s207 = sand.u32 %s34, 1
        %s208 = scalar_lea.sflag [#allocation4], %s207
        %s209 = sand.u32 %s34, 1
        %s210 = smul.addr %s209, 72
        %s211 = scalar_lea.vmem [#allocation3], %s210
        // Predicated region
        $region29: #{tpu_custom_call.1} parent=27 // pred_check
          %p212 = pneg %p47
        $region30: #{tpu_custom_call.1} parent=27 // pred_check_branch
          %214 = sbr.rel (%p212) target = $region32
        $region31: #{tpu_custom_call.1} parent=27 // pred_region
          %215 = dma.done %s208, 1152
        $region32: #{tpu_custom_call.1} parent=27 // pred_fallthru
          _
        // Predicated region
        $region33: #{tpu_custom_call.1} parent=27 // pred_check
          %p216 = pneg %p68
        $region34: #{tpu_custom_call.1} parent=27 // pred_check_branch
          %218 = sbr.rel (%p216) target = $region36
        $region35: #{tpu_custom_call.1} parent=27 // pred_region
          %219 = dma.done [#allocation7], 4096
        $region36: #{tpu_custom_call.1} parent=27 // pred_fallthru
          _
        %s220 = sand.u32 %s34, 1
        %s221 = scalar_lea.sflag [#allocation4], %s220
        %s222 = sand.u32 %s34, 1
        %s223 = smul.addr %s222, 72
        %s224 = scalar_lea.vmem [#allocation3], %s223
        %p225 = pneg %p47
        %p226 = pneg %p44
        %p227 = pneg %p68
        %p228 = pneg %p65
        %p229 = pneg %p94
        %p230 = pneg %p91
        %s231 = sand.u32 %s81, 1
        %s232 = scalar_lea.sflag [#allocation5], %s231
        %s233 = sand.u32 %s81, 1
        %s234 = smul.addr %s233, 32
        %s235 = scalar_lea.vmem [#allocation8], %s234
        %p236 = pneg %p120
        %p237 = pneg %p117
        %s238 = sand.u32 %s26, 1
        %s239 = scalar_lea.sflag [#allocation10], %s238
        %s240 = sand.u32 %s107, 1
        %s241 = smul.addr %s240, 8
        %s242 = scalar_lea.vmem [#allocation9], %s241
        %p243 = pneg %p146
        %p244 = pneg %p143
        %s245 = sand.u32 %s26, 1
        %s246 = scalar_lea.sflag [#allocation10], %s245
        %s247 = sand.u32 %s133, 1
        %s248 = smul.addr %s247, 8
        %s249 = scalar_lea.vmem [#allocation11], %s248
        %s250 = smul.u32 2, %s26
        %v252 = vld [vmem:[%s211] sm:$0xf]
        %v253 = vld [vmem:[%s211 + $0x4] sm:$0xf]
        %v254 = vld [vmem:[%s211 + $0x8] sm:$0xf]
        %v255 = vld [vmem:[%s211 + $0xc] sm:$0xf]
        %v256 = vld [vmem:[%s211 + $0x10] sm:$0xf]
        %v257 = vld [vmem:[%s211 + $0x14] sm:$0xf]
        %v258 = vld [vmem:[%s211 + $0x18] sm:$0xf]
        %v259 = vld [vmem:[%s211 + $0x1c] sm:$0xf]
        %v260 = vld [vmem:[#allocation6] sm:$0xf]
        %v261 = vld [vmem:[#allocation6 + $0x4] sm:$0xf]
        %v262 = vld [vmem:[#allocation6 + $0x8] sm:$0xf]
        %v263 = vld [vmem:[#allocation6 + $0xc] sm:$0xf]
        %v264 = vld [vmem:[#allocation6 + $0x10] sm:$0xf]
        %v265 = vld [vmem:[#allocation6 + $0x14] sm:$0xf]
        %v266 = vld [vmem:[#allocation6 + $0x18] sm:$0xf]
        %v267 = vld [vmem:[#allocation6 + $0x1c] sm:$0xf]
        %v268 = vld [vmem:[#allocation6 + $0x20] sm:$0xf]
        %v269 = vld [vmem:[#allocation6 + $0x24] sm:$0xf]
        %v270 = vld [vmem:[#allocation6 + $0x28] sm:$0xf]
        %v271 = vld [vmem:[#allocation6 + $0x2c] sm:$0xf]
        %v272 = vld [vmem:[#allocation6 + $0x30] sm:$0xf]
        %v273 = vld [vmem:[#allocation6 + $0x34] sm:$0xf]
        %v274 = vld [vmem:[#allocation6 + $0x38] sm:$0xf]
        %v275 = vld [vmem:[#allocation6 + $0x3c] sm:$0xf]
        %v284 = vunpack.c.l.b16 %v252
        %v285 = vunpack.c.l.b16 %v253
        %v286 = vunpack.c.l.b16 %v254
        %v287 = vunpack.c.l.b16 %v255
        %v288 = vunpack.c.l.b16 %v256
        %v289 = vunpack.c.l.b16 %v257
        %v290 = vunpack.c.l.b16 %v258
        %v291 = vunpack.c.l.b16 %v259
        %v292 = vpack.c.b16 %v285, %v284
        %v293 = vpack.c.b16 %v287, %v286
        %v294 = vpack.c.b16 %v289, %v288
        %v295 = vpack.c.b16 %v291, %v290
        %v316 = vunpack.c.l.b16 %v260
        %v317 = vunpack.c.l.b16 %v261
        %v318 = vunpack.c.l.b16 %v262
        %v319 = vunpack.c.l.b16 %v263
        %v320 = vunpack.c.l.b16 %v264
        %v321 = vunpack.c.l.b16 %v265
        %v322 = vunpack.c.l.b16 %v266
        %v323 = vunpack.c.l.b16 %v267
        %v324 = vunpack.c.l.b16 %v268
        %v325 = vunpack.c.l.b16 %v269
        %v326 = vunpack.c.l.b16 %v270
        %v327 = vunpack.c.l.b16 %v271
        %v328 = vunpack.c.l.b16 %v272
        %v329 = vunpack.c.l.b16 %v273
        %v330 = vunpack.c.l.b16 %v274
        %v331 = vunpack.c.l.b16 %v275
        %v332 = vpack.c.b16 %v317, %v316
        %v333 = vpack.c.b16 %v319, %v318
        %v334 = vpack.c.b16 %v321, %v320
        %v335 = vpack.c.b16 %v323, %v322
        %v336 = vpack.c.b16 %v325, %v324
        %v337 = vpack.c.b16 %v327, %v326
        %v338 = vpack.c.b16 %v329, %v328
        %v339 = vpack.c.b16 %v331, %v330
        %348 = vmatprep.subr.bf16.mxu0 0
        %349 = vmatpush1.bf16.msra.mxu0 %v332
        %350 = vmatprep.subr.bf16.mxu0 0
        %351 = vmatpush1.bf16.msra.mxu0 %v333
        %352 = vmatprep.subr.bf16.mxu0 0
        %353 = vmatpush1.bf16.msra.mxu0 %v334
        %354 = vmatprep.subr.bf16.mxu0 0
        %355 = vmatpush1.bf16.msra.mxu0 %v335
        %356 = vmatprep.subr.bf16.mxu0 0
        %357 = vmatpush1.bf16.msra.mxu0 %v336
        %358 = vmatprep.subr.bf16.mxu0 0
        %359 = vmatpush1.bf16.msra.mxu0 %v337
        %360 = vmatprep.subr.bf16.mxu0 0
        %361 = vmatpush1.bf16.msra.mxu0 %v338
        %362 = vmatprep.subr.bf16.mxu0 0
        %363 = vmatpush1.bf16.msra.mxu0 %v339
        %364 = vmatprep.subr.bf16.mxu0 0
        %365 = vmatpush1.bf16.msra.mxu0 0
        %366 = vmatprep.subr.bf16.mxu0 0
        %367 = vmatpush1.bf16.msra.mxu0 0
        %368 = vmatprep.subr.bf16.mxu0 0
        %369 = vmatpush1.bf16.msra.mxu0 0
        %370 = vmatprep.subr.bf16.mxu0 0
        %371 = vmatpush1.bf16.msra.mxu0 0
        %372 = vmatprep.subr.bf16.mxu0 0
        %373 = vmatpush1.bf16.msra.mxu0 0
        %374 = vmatprep.subr.bf16.mxu0 0
        %375 = vmatpush1.bf16.msra.mxu0 0
        %376 = vmatprep.subr.bf16.mxu0 0
        %377 = vmatpush1.bf16.msra.mxu0 0
        %378 = vmatprep.subr.bf16.mxu0 0
        %379 = vmatpush1.bf16.msra.mxu0 0
        %380 = vmatprep.mubr.bf16.mxu0 0
        %381 = vmatmul.mubr.bf16.gmra.mrb[0].mxu0 %v292
        %v382 = vpop.f32.mrb[0].mxu0
        %v383 = vadd.f32 0.0, %v382
        %v384 = vpop.f32.mrb[0].mxu0
        %v385 = vpop.f32.mrb[0].mxu0
        %v386 = vadd.f32 0.0, %v385
        %v387 = vpop.f32.mrb[0].mxu0
        %388 = vmatprep.mubr.bf16.mxu0 0
        %389 = vmatmul.mubr.bf16.gmra.mrb[0].mxu0 %v293
        %v390 = vpop.f32.mrb[0].mxu0
        %v391 = vadd.f32 0.0, %v390
        %v392 = vpop.f32.mrb[0].mxu0
        %v393 = vpop.f32.mrb[0].mxu0
        %v394 = vadd.f32 0.0, %v393
        %v395 = vpop.f32.mrb[0].mxu0
        %396 = vmatprep.mubr.bf16.mxu0 0
        %397 = vmatmul.mubr.bf16.gmra.mrb[0].mxu0 %v294
        %v398 = vpop.f32.mrb[0].mxu0
        %v399 = vadd.f32 0.0, %v398
        %v400 = vpop.f32.mrb[0].mxu0
        %v401 = vpop.f32.mrb[0].mxu0
        %v402 = vadd.f32 0.0, %v401
        %v403 = vpop.f32.mrb[0].mxu0
        %404 = vmatprep.mubr.bf16.mxu0 0
        %405 = vmatmul.mubr.bf16.gmra.mrb[0].mxu0 %v295
        %v406 = vpop.f32.mrb[0].mxu0
        %v407 = vadd.f32 0.0, %v406
        %v408 = vpop.f32.mrb[0].mxu0
        %v409 = vpop.f32.mrb[0].mxu0
        %v410 = vadd.f32 0.0, %v409
        %v411 = vpop.f32.mrb[0].mxu0
        %412 = vdwg.mxu0
        %413 = vst [vmem:[#allocation2] sm:$0xff] %v383
        %414 = vst [vmem:[#allocation2 + $0x8] sm:$0xff] %v386
        %415 = vst [vmem:[#allocation2 + $0x10] sm:$0xff] %v391
        %416 = vst [vmem:[#allocation2 + $0x18] sm:$0xff] %v394
        %417 = vst [vmem:[#allocation2 + $0x20] sm:$0xff] %v399
        %418 = vst [vmem:[#allocation2 + $0x28] sm:$0xff] %v402
        %419 = vst [vmem:[#allocation2 + $0x30] sm:$0xff] %v407
        %420 = vst [vmem:[#allocation2 + $0x38] sm:$0xff] %v410
        %v421 = vld [vmem:[#allocation2] sm:$0xff]
        %v422 = vld [vmem:[#allocation2 + $0x8] sm:$0xff]
        %v423 = vld [vmem:[#allocation2 + $0x10] sm:$0xff]
        %v424 = vld [vmem:[#allocation2 + $0x18] sm:$0xff]
        %v425 = vld [vmem:[#allocation2 + $0x20] sm:$0xff]
        %v426 = vld [vmem:[#allocation2 + $0x28] sm:$0xff]
        %v427 = vld [vmem:[#allocation2 + $0x30] sm:$0xff]
        %v428 = vld [vmem:[#allocation2 + $0x38] sm:$0xff]
        %s429 = scalar_lea.vmem %s211, 36 [#allocation3]
        %v430 = vld [vmem:[%s429] sm:$0xf]
        %v431 = vld [vmem:[%s429 + $0x4] sm:$0xf]
        %v432 = vld [vmem:[%s429 + $0x8] sm:$0xf]
        %v433 = vld [vmem:[%s429 + $0xc] sm:$0xf]
        %v434 = vld [vmem:[%s429 + $0x10] sm:$0xf]
        %v435 = vld [vmem:[%s429 + $0x14] sm:$0xf]
        %v436 = vld [vmem:[%s429 + $0x18] sm:$0xf]
        %v437 = vld [vmem:[%s429 + $0x1c] sm:$0xf]
        %s438 = scalar_lea.vmem [#allocation6], 64
        %v439 = vld [vmem:[%s438] sm:$0xf]
        %v440 = vld [vmem:[%s438 + $0x4] sm:$0xf]
        %v441 = vld [vmem:[%s438 + $0x8] sm:$0xf]
        %v442 = vld [vmem:[%s438 + $0xc] sm:$0xf]
        %v443 = vld [vmem:[%s438 + $0x10] sm:$0xf]
        %v444 = vld [vmem:[%s438 + $0x14] sm:$0xf]
        %v445 = vld [vmem:[%s438 + $0x18] sm:$0xf]
        %v446 = vld [vmem:[%s438 + $0x1c] sm:$0xf]
        %v447 = vld [vmem:[%s438 + $0x20] sm:$0xf]
        %v448 = vld [vmem:[%s438 + $0x24] sm:$0xf]
        %v449 = vld [vmem:[%s438 + $0x28] sm:$0xf]
        %v450 = vld [vmem:[%s438 + $0x2c] sm:$0xf]
        %v451 = vld [vmem:[%s438 + $0x30] sm:$0xf]
        %v452 = vld [vmem:[%s438 + $0x34] sm:$0xf]
        %v453 = vld [vmem:[%s438 + $0x38] sm:$0xf]
        %v454 = vld [vmem:[%s438 + $0x3c] sm:$0xf]
        %v463 = vunpack.c.l.b16 %v430
        %v464 = vunpack.c.l.b16 %v431
        %v465 = vunpack.c.l.b16 %v432
        %v466 = vunpack.c.l.b16 %v433
        %v467 = vunpack.c.l.b16 %v434
        %v468 = vunpack.c.l.b16 %v435
        %v469 = vunpack.c.l.b16 %v436
        %v470 = vunpack.c.l.b16 %v437
        %v471 = vpack.c.b16 %v464, %v463
        %v472 = vpack.c.b16 %v466, %v465
        %v473 = vpack.c.b16 %v468, %v467
        %v474 = vpack.c.b16 %v470, %v469
        %v495 = vunpack.c.l.b16 %v439
        %v496 = vunpack.c.l.b16 %v440
        %v497 = vunpack.c.l.b16 %v441
        %v498 = vunpack.c.l.b16 %v442
        %v499 = vunpack.c.l.b16 %v443
        %v500 = vunpack.c.l.b16 %v444
        %v501 = vunpack.c.l.b16 %v445
        %v502 = vunpack.c.l.b16 %v446
        %v503 = vunpack.c.l.b16 %v447
        %v504 = vunpack.c.l.b16 %v448
        %v505 = vunpack.c.l.b16 %v449
        %v506 = vunpack.c.l.b16 %v450
        %v507 = vunpack.c.l.b16 %v451
        %v508 = vunpack.c.l.b16 %v452
        %v509 = vunpack.c.l.b16 %v453
        %v510 = vunpack.c.l.b16 %v454
        %v511 = vpack.c.b16 %v496, %v495
        %v512 = vpack.c.b16 %v498, %v497
        %v513 = vpack.c.b16 %v500, %v499
        %v514 = vpack.c.b16 %v502, %v501
        %v515 = vpack.c.b16 %v504, %v503
        %v516 = vpack.c.b16 %v506, %v505
        %v517 = vpack.c.b16 %v508, %v507
        %v518 = vpack.c.b16 %v510, %v509
        %527 = vmatprep.subr.bf16.mxu0 0
        %528 = vmatpush1.bf16.msra.mxu0 %v511
        %529 = vmatprep.subr.bf16.mxu0 0
        %530 = vmatpush1.bf16.msra.mxu0 %v512
        %531 = vmatprep.subr.bf16.mxu0 0
        %532 = vmatpush1.bf16.msra.mxu0 %v513
        %533 = vmatprep.subr.bf16.mxu0 0
        %534 = vmatpush1.bf16.msra.mxu0 %v514
        %535 = vmatprep.subr.bf16.mxu0 0
        %536 = vmatpush1.bf16.msra.mxu0 %v515
        %537 = vmatprep.subr.bf16.mxu0 0
        %538 = vmatpush1.bf16.msra.mxu0 %v516
        %539 = vmatprep.subr.bf16.mxu0 0
        %540 = vmatpush1.bf16.msra.mxu0 %v517
        %541 = vmatprep.subr.bf16.mxu0 0
        %542 = vmatpush1.bf16.msra.mxu0 %v518
        %543 = vmatprep.subr.bf16.mxu0 0
        %544 = vmatpush1.bf16.msra.mxu0 0
        %545 = vmatprep.subr.bf16.mxu0 0
        %546 = vmatpush1.bf16.msra.mxu0 0
        %547 = vmatprep.subr.bf16.mxu0 0
        %548 = vmatpush1.bf16.msra.mxu0 0
        %549 = vmatprep.subr.bf16.mxu0 0
        %550 = vmatpush1.bf16.msra.mxu0 0
        %551 = vmatprep.subr.bf16.mxu0 0
        %552 = vmatpush1.bf16.msra.mxu0 0
        %553 = vmatprep.subr.bf16.mxu0 0
        %554 = vmatpush1.bf16.msra.mxu0 0
        %555 = vmatprep.subr.bf16.mxu0 0
        %556 = vmatpush1.bf16.msra.mxu0 0
        %557 = vmatprep.subr.bf16.mxu0 0
        %558 = vmatpush1.bf16.msra.mxu0 0
        %559 = vmatprep.mubr.bf16.mxu0 0
        %560 = vmatmul.mubr.bf16.gmra.mrb[0].mxu0 %v471
        %v561 = vpop.f32.mrb[0].mxu0
        %v562 = vadd.f32 0.0, %v561
        %v563 = vpop.f32.mrb[0].mxu0
        %v564 = vpop.f32.mrb[0].mxu0
        %v565 = vadd.f32 0.0, %v564
        %v566 = vpop.f32.mrb[0].mxu0
        %567 = vmatprep.mubr.bf16.mxu0 0
        %568 = vmatmul.mubr.bf16.gmra.mrb[0].mxu0 %v472
        %v569 = vpop.f32.mrb[0].mxu0
        %v570 = vadd.f32 0.0, %v569
        %v571 = vpop.f32.mrb[0].mxu0
        %v572 = vpop.f32.mrb[0].mxu0
        %v573 = vadd.f32 0.0, %v572
        %v574 = vpop.f32.mrb[0].mxu0
        %575 = vmatprep.mubr.bf16.mxu0 0
        %576 = vmatmul.mubr.bf16.gmra.mrb[0].mxu0 %v473
        %v577 = vpop.f32.mrb[0].mxu0
        %v578 = vadd.f32 0.0, %v577
        %v579 = vpop.f32.mrb[0].mxu0
        %v580 = vpop.f32.mrb[0].mxu0
        %v581 = vadd.f32 0.0, %v580
        %v582 = vpop.f32.mrb[0].mxu0
        %583 = vmatprep.mubr.bf16.mxu0 0
        %584 = vmatmul.mubr.bf16.gmra.mrb[0].mxu0 %v474
        %v585 = vpop.f32.mrb[0].mxu0
        %v586 = vadd.f32 0.0, %v585
        %v587 = vpop.f32.mrb[0].mxu0
        %v588 = vpop.f32.mrb[0].mxu0
        %v589 = vadd.f32 0.0, %v588
        %v590 = vpop.f32.mrb[0].mxu0
        %591 = vdwg.mxu0
        %v592 = vadd.f32 %v421, %v562
        %v593 = vadd.f32 %v422, %v565
        %v594 = vadd.f32 %v423, %v570
        %v595 = vadd.f32 %v424, %v573
        %v596 = vadd.f32 %v425, %v578
        %v597 = vadd.f32 %v426, %v581
        %v598 = vadd.f32 %v427, %v586
        %v599 = vadd.f32 %v428, %v589
        %600 = vst [vmem:[#allocation2] sm:$0xff] %v592
        %601 = vst [vmem:[#allocation2 + $0x8] sm:$0xff] %v593
        %602 = vst [vmem:[#allocation2 + $0x10] sm:$0xff] %v594
        %603 = vst [vmem:[#allocation2 + $0x18] sm:$0xff] %v595
        %604 = vst [vmem:[#allocation2 + $0x20] sm:$0xff] %v596
        %605 = vst [vmem:[#allocation2 + $0x28] sm:$0xff] %v597
        %606 = vst [vmem:[#allocation2 + $0x30] sm:$0xff] %v598
        %607 = vst [vmem:[#allocation2 + $0x38] sm:$0xff] %v599
        %v608 = vld [vmem:[#allocation2] sm:$0xff]
        %v609 = vld [vmem:[#allocation2 + $0x8] sm:$0xff]
        %v610 = vld [vmem:[#allocation2 + $0x10] sm:$0xff]
        %v611 = vld [vmem:[#allocation2 + $0x18] sm:$0xff]
        %v612 = vld [vmem:[#allocation2 + $0x20] sm:$0xff]
        %v613 = vld [vmem:[#allocation2 + $0x28] sm:$0xff]
        %v614 = vld [vmem:[#allocation2 + $0x30] sm:$0xff]
        %v615 = vld [vmem:[#allocation2 + $0x38] sm:$0xff]
        %v616 = vld [vmem:[%s211 + $0x4] sm:$0xf]
        %v617 = vld [vmem:[%s211 + $0x8] sm:$0xf]
        %v618 = vld [vmem:[%s211 + $0xc] sm:$0xf]
        %v619 = vld [vmem:[%s211 + $0x10] sm:$0xf]
        %v620 = vld [vmem:[%s211 + $0x14] sm:$0xf]
        %v621 = vld [vmem:[%s211 + $0x18] sm:$0xf]
        %v622 = vld [vmem:[%s211 + $0x1c] sm:$0xf]
        %v623 = vld [vmem:[%s211 + $0x20] sm:$0xf]
        %s624 = scalar_lea.vmem [#allocation6], 128
        %v625 = vld [vmem:[%s624] sm:$0xf]
        %v626 = vld [vmem:[%s624 + $0x4] sm:$0xf]
        %v627 = vld [vmem:[%s624 + $0x8] sm:$0xf]
        %v628 = vld [vmem:[%s624 + $0xc] sm:$0xf]
        %v629 = vld [vmem:[%s624 + $0x10] sm:$0xf]
        %v630 = vld [vmem:[%s624 + $0x14] sm:$0xf]
        %v631 = vld [vmem:[%s624 + $0x18] sm:$0xf]
        %v632 = vld [vmem:[%s624 + $0x1c] sm:$0xf]
        %v633 = vld [vmem:[%s624 + $0x20] sm:$0xf]
        %v634 = vld [vmem:[%s624 + $0x24] sm:$0xf]
        %v635 = vld [vmem:[%s624 + $0x28] sm:$0xf]
        %v636 = vld [vmem:[%s624 + $0x2c] sm:$0xf]
        %v637 = vld [vmem:[%s624 + $0x30] sm:$0xf]
        %v638 = vld [vmem:[%s624 + $0x34] sm:$0xf]
        %v639 = vld [vmem:[%s624 + $0x38] sm:$0xf]
        %v640 = vld [vmem:[%s624 + $0x3c] sm:$0xf]
        %v649 = vunpack.c.l.b16 %v616
        %v650 = vunpack.c.l.b16 %v617
        %v651 = vunpack.c.l.b16 %v618
        %v652 = vunpack.c.l.b16 %v619
        %v653 = vunpack.c.l.b16 %v620
        %v654 = vunpack.c.l.b16 %v621
        %v655 = vunpack.c.l.b16 %v622
        %v656 = vunpack.c.l.b16 %v623
        %v657 = vpack.c.b16 %v650, %v649
        %v658 = vpack.c.b16 %v652, %v651
        %v659 = vpack.c.b16 %v654, %v653
        %v660 = vpack.c.b16 %v656, %v655
        %v681 = vunpack.c.l.b16 %v625
        %v682 = vunpack.c.l.b16 %v626
        %v683 = vunpack.c.l.b16 %v627
        %v684 = vunpack.c.l.b16 %v628
        %v685 = vunpack.c.l.b16 %v629
        %v686 = vunpack.c.l.b16 %v630
        %v687 = vunpack.c.l.b16 %v631
        %v688 = vunpack.c.l.b16 %v632
        %v689 = vunpack.c.l.b16 %v633
        %v690 = vunpack.c.l.b16 %v634
        %v691 = vunpack.c.l.b16 %v635
        %v692 = vunpack.c.l.b16 %v636
        %v693 = vunpack.c.l.b16 %v637
        %v694 = vunpack.c.l.b16 %v638
        %v695 = vunpack.c.l.b16 %v639
        %v696 = vunpack.c.l.b16 %v640
        %v697 = vpack.c.b16 %v682, %v681
        %v698 = vpack.c.b16 %v684, %v683
        %v699 = vpack.c.b16 %v686, %v685
        %v700 = vpack.c.b16 %v688, %v687
        %v701 = vpack.c.b16 %v690, %v689
        %v702 = vpack.c.b16 %v692, %v691
        %v703 = vpack.c.b16 %v694, %v693
        %v704 = vpack.c.b16 %v696, %v695
        %713 = vmatprep.subr.bf16.mxu0 0
        %714 = vmatpush1.bf16.msra.mxu0 %v697
        %715 = vmatprep.subr.bf16.mxu0 0
        %716 = vmatpush1.bf16.msra.mxu0 %v698
        %717 = vmatprep.subr.bf16.mxu0 0
        %718 = vmatpush1.bf16.msra.mxu0 %v699
        %719 = vmatprep.subr.bf16.mxu0 0
        %720 = vmatpush1.bf16.msra.mxu0 %v700
        %721 = vmatprep.subr.bf16.mxu0 0
        %722 = vmatpush1.bf16.msra.mxu0 %v701
        %723 = vmatprep.subr.bf16.mxu0 0
        %724 = vmatpush1.bf16.msra.mxu0 %v702
        %725 = vmatprep.subr.bf16.mxu0 0
        %726 = vmatpush1.bf16.msra.mxu0 %v703
        %727 = vmatprep.subr.bf16.mxu0 0
        %728 = vmatpush1.bf16.msra.mxu0 %v704
        %729 = vmatprep.subr.bf16.mxu0 0
        %730 = vmatpush1.bf16.msra.mxu0 0
        %731 = vmatprep.subr.bf16.mxu0 0
        %732 = vmatpush1.bf16.msra.mxu0 0
        %733 = vmatprep.subr.bf16.mxu0 0
        %734 = vmatpush1.bf16.msra.mxu0 0
        %735 = vmatprep.subr.bf16.mxu0 0
        %736 = vmatpush1.bf16.msra.mxu0 0
        %737 = vmatprep.subr.bf16.mxu0 0
        %738 = vmatpush1.bf16.msra.mxu0 0
        %739 = vmatprep.subr.bf16.mxu0 0
        %740 = vmatpush1.bf16.msra.mxu0 0
        %741 = vmatprep.subr.bf16.mxu0 0
        %742 = vmatpush1.bf16.msra.mxu0 0
        %743 = vmatprep.subr.bf16.mxu0 0
        %744 = vmatpush1.bf16.msra.mxu0 0
        %745 = vmatprep.mubr.bf16.mxu0 0
        %746 = vmatmul.mubr.bf16.gmra.mrb[0].mxu0 %v657
        %v747 = vpop.f32.mrb[0].mxu0
        %v748 = vadd.f32 0.0, %v747
        %v749 = vpop.f32.mrb[0].mxu0
        %v750 = vpop.f32.mrb[0].mxu0
        %v751 = vadd.f32 0.0, %v750
        %v752 = vpop.f32.mrb[0].mxu0
        %753 = vmatprep.mubr.bf16.mxu0 0
        %754 = vmatmul.mubr.bf16.gmra.mrb[0].mxu0 %v658
        %v755 = vpop.f32.mrb[0].mxu0
        %v756 = vadd.f32 0.0, %v755
        %v757 = vpop.f32.mrb[0].mxu0
        %v758 = vpop.f32.mrb[0].mxu0
        %v759 = vadd.f32 0.0, %v758
        %v760 = vpop.f32.mrb[0].mxu0
        %761 = vmatprep.mubr.bf16.mxu0 0
        %762 = vmatmul.mubr.bf16.gmra.mrb[0].mxu0 %v659
        %v763 = vpop.f32.mrb[0].mxu0
        %v764 = vadd.f32 0.0, %v763
        %v765 = vpop.f32.mrb[0].mxu0
        %v766 = vpop.f32.mrb[0].mxu0
        %v767 = vadd.f32 0.0, %v766
        %v768 = vpop.f32.mrb[0].mxu0
        %769 = vmatprep.mubr.bf16.mxu0 0
        %770 = vmatmul.mubr.bf16.gmra.mrb[0].mxu0 %v660
        %v771 = vpop.f32.mrb[0].mxu0
        %v772 = vadd.f32 0.0, %v771
        %v773 = vpop.f32.mrb[0].mxu0
        %v774 = vpop.f32.mrb[0].mxu0
        %v775 = vadd.f32 0.0, %v774
        %v776 = vpop.f32.mrb[0].mxu0
        %777 = vdwg.mxu0
        %v778 = vadd.f32 %v608, %v748
        %v779 = vadd.f32 %v609, %v751
        %v780 = vadd.f32 %v610, %v756
        %v781 = vadd.f32 %v611, %v759
        %v782 = vadd.f32 %v612, %v764
        %v783 = vadd.f32 %v613, %v767
        %v784 = vadd.f32 %v614, %v772
        %v785 = vadd.f32 %v615, %v775
        %786 = vst [vmem:[#allocation2] sm:$0xff] %v778
        %787 = vst [vmem:[#allocation2 + $0x8] sm:$0xff] %v779
        %788 = vst [vmem:[#allocation2 + $0x10] sm:$0xff] %v780
        %789 = vst [vmem:[#allocation2 + $0x18] sm:$0xff] %v781
        %790 = vst [vmem:[#allocation2 + $0x20] sm:$0xff] %v782
        %791 = vst [vmem:[#allocation2 + $0x28] sm:$0xff] %v783
        %792 = vst [vmem:[#allocation2 + $0x30] sm:$0xff] %v784
        %793 = vst [vmem:[#allocation2 + $0x38] sm:$0xff] %v785
        %v794 = vld [vmem:[#allocation2] sm:$0xff]
        %v795 = vld [vmem:[#allocation2 + $0x8] sm:$0xff]
        %v796 = vld [vmem:[#allocation2 + $0x10] sm:$0xff]
        %v797 = vld [vmem:[#allocation2 + $0x18] sm:$0xff]
        %v798 = vld [vmem:[#allocation2 + $0x20] sm:$0xff]
        %v799 = vld [vmem:[#allocation2 + $0x28] sm:$0xff]
        %v800 = vld [vmem:[#allocation2 + $0x30] sm:$0xff]
        %v801 = vld [vmem:[#allocation2 + $0x38] sm:$0xff]
        %v802 = vld [vmem:[%s429 + $0x4] sm:$0xf]
        %v803 = vld [vmem:[%s429 + $0x8] sm:$0xf]
        %v804 = vld [vmem:[%s429 + $0xc] sm:$0xf]
        %v805 = vld [vmem:[%s429 + $0x10] sm:$0xf]
        %v806 = vld [vmem:[%s429 + $0x14] sm:$0xf]
        %v807 = vld [vmem:[%s429 + $0x18] sm:$0xf]
        %v808 = vld [vmem:[%s429 + $0x1c] sm:$0xf]
        %v809 = vld [vmem:[%s429 + $0x20] sm:$0xf]
        %s810 = scalar_lea.vmem [#allocation6], 192
        %v811 = vld [vmem:[%s810] sm:$0xf]
        %v812 = vld [vmem:[%s810 + $0x4] sm:$0xf]
        %v813 = vld [vmem:[%s810 + $0x8] sm:$0xf]
        %v814 = vld [vmem:[%s810 + $0xc] sm:$0xf]
        %v815 = vld [vmem:[%s810 + $0x10] sm:$0xf]
        %v816 = vld [vmem:[%s810 + $0x14] sm:$0xf]
        %v817 = vld [vmem:[%s810 + $0x18] sm:$0xf]
        %v818 = vld [vmem:[%s810 + $0x1c] sm:$0xf]
        %v819 = vld [vmem:[%s810 + $0x20] sm:$0xf]
        %v820 = vld [vmem:[%s810 + $0x24] sm:$0xf]
        %v821 = vld [vmem:[%s810 + $0x28] sm:$0xf]
        %v822 = vld [vmem:[%s810 + $0x2c] sm:$0xf]
        %v823 = vld [vmem:[%s810 + $0x30] sm:$0xf]
        %v824 = vld [vmem:[%s810 + $0x34] sm:$0xf]
        %v825 = vld [vmem:[%s810 + $0x38] sm:$0xf]
        %v826 = vld [vmem:[%s810 + $0x3c] sm:$0xf]
        %v835 = vunpack.c.l.b16 %v802
        %v836 = vunpack.c.l.b16 %v803
        %v837 = vunpack.c.l.b16 %v804
        %v838 = vunpack.c.l.b16 %v805
        %v839 = vunpack.c.l.b16 %v806
        %v840 = vunpack.c.l.b16 %v807
        %v841 = vunpack.c.l.b16 %v808
        %v842 = vunpack.c.l.b16 %v809
        %v843 = vpack.c.b16 %v836, %v835
        %v844 = vpack.c.b16 %v838, %v837
        %v845 = vpack.c.b16 %v840, %v839
        %v846 = vpack.c.b16 %v842, %v841
        %v867 = vunpack.c.l.b16 %v811
        %v868 = vunpack.c.l.b16 %v812
        %v869 = vunpack.c.l.b16 %v813
        %v870 = vunpack.c.l.b16 %v814
        %v871 = vunpack.c.l.b16 %v815
        %v872 = vunpack.c.l.b16 %v816
        %v873 = vunpack.c.l.b16 %v817
        %v874 = vunpack.c.l.b16 %v818
        %v875 = vunpack.c.l.b16 %v819
        %v876 = vunpack.c.l.b16 %v820
        %v877 = vunpack.c.l.b16 %v821
        %v878 = vunpack.c.l.b16 %v822
        %v879 = vunpack.c.l.b16 %v823
        %v880 = vunpack.c.l.b16 %v824
        %v881 = vunpack.c.l.b16 %v825
        %v882 = vunpack.c.l.b16 %v826
        %v883 = vpack.c.b16 %v868, %v867
        %v884 = vpack.c.b16 %v870, %v869
        %v885 = vpack.c.b16 %v872, %v871
        %v886 = vpack.c.b16 %v874, %v873
        %v887 = vpack.c.b16 %v876, %v875
        %v888 = vpack.c.b16 %v878, %v877
        %v889 = vpack.c.b16 %v880, %v879
        %v890 = vpack.c.b16 %v882, %v881
        %899 = vmatprep.subr.bf16.mxu0 0
        %900 = vmatpush1.bf16.msra.mxu0 %v883
        %901 = vmatprep.subr.bf16.mxu0 0
        %902 = vmatpush1.bf16.msra.mxu0 %v884
        %903 = vmatprep.subr.bf16.mxu0 0
        %904 = vmatpush1.bf16.msra.mxu0 %v885
        %905 = vmatprep.subr.bf16.mxu0 0
        %906 = vmatpush1.bf16.msra.mxu0 %v886
        %907 = vmatprep.subr.bf16.mxu0 0
        %908 = vmatpush1.bf16.msra.mxu0 %v887
        %909 = vmatprep.subr.bf16.mxu0 0
        %910 = vmatpush1.bf16.msra.mxu0 %v888
        %911 = vmatprep.subr.bf16.mxu0 0
        %912 = vmatpush1.bf16.msra.mxu0 %v889
        %913 = vmatprep.subr.bf16.mxu0 0
        %914 = vmatpush1.bf16.msra.mxu0 %v890
        %915 = vmatprep.subr.bf16.mxu0 0
        %916 = vmatpush1.bf16.msra.mxu0 0
        %917 = vmatprep.subr.bf16.mxu0 0
        %918 = vmatpush1.bf16.msra.mxu0 0
        %919 = vmatprep.subr.bf16.mxu0 0
        %920 = vmatpush1.bf16.msra.mxu0 0
        %921 = vmatprep.subr.bf16.mxu0 0
        %922 = vmatpush1.bf16.msra.mxu0 0
        %923 = vmatprep.subr.bf16.mxu0 0
        %924 = vmatpush1.bf16.msra.mxu0 0
        %925 = vmatprep.subr.bf16.mxu0 0
        %926 = vmatpush1.bf16.msra.mxu0 0
        %927 = vmatprep.subr.bf16.mxu0 0
        %928 = vmatpush1.bf16.msra.mxu0 0
        %929 = vmatprep.subr.bf16.mxu0 0
        %930 = vmatpush1.bf16.msra.mxu0 0
        %931 = vmatprep.mubr.bf16.mxu0 0
        %932 = vmatmul.mubr.bf16.gmra.mrb[0].mxu0 %v843
        %v933 = vpop.f32.mrb[0].mxu0
        %v934 = vadd.f32 0.0, %v933
        %v935 = vpop.f32.mrb[0].mxu0
        %v936 = vpop.f32.mrb[0].mxu0
        %v937 = vadd.f32 0.0, %v936
        %v938 = vpop.f32.mrb[0].mxu0
        %939 = vmatprep.mubr.bf16.mxu0 0
        %940 = vmatmul.mubr.bf16.gmra.mrb[0].mxu0 %v844
        %v941 = vpop.f32.mrb[0].mxu0
        %v942 = vadd.f32 0.0, %v941
        %v943 = vpop.f32.mrb[0].mxu0
        %v944 = vpop.f32.mrb[0].mxu0
        %v945 = vadd.f32 0.0, %v944
        %v946 = vpop.f32.mrb[0].mxu0
        %947 = vmatprep.mubr.bf16.mxu0 0
        %948 = vmatmul.mubr.bf16.gmra.mrb[0].mxu0 %v845
        %v949 = vpop.f32.mrb[0].mxu0
        %v950 = vadd.f32 0.0, %v949
        %v951 = vpop.f32.mrb[0].mxu0
        %v952 = vpop.f32.mrb[0].mxu0
        %v953 = vadd.f32 0.0, %v952
        %v954 = vpop.f32.mrb[0].mxu0
        %955 = vmatprep.mubr.bf16.mxu0 0
        %956 = vmatmul.mubr.bf16.gmra.mrb[0].mxu0 %v846
        %v957 = vpop.f32.mrb[0].mxu0
        %v958 = vadd.f32 0.0, %v957
        %v959 = vpop.f32.mrb[0].mxu0
        %v960 = vpop.f32.mrb[0].mxu0
        %v961 = vadd.f32 0.0, %v960
        %v962 = vpop.f32.mrb[0].mxu0
        %963 = vdwg.mxu0
        %v964 = vadd.f32 %v794, %v934
        %v965 = vadd.f32 %v795, %v937
        %v966 = vadd.f32 %v796, %v942
        %v967 = vadd.f32 %v797, %v945
        %v968 = vadd.f32 %v798, %v950
        %v969 = vadd.f32 %v799, %v953
        %v970 = vadd.f32 %v800, %v958
        %v971 = vadd.f32 %v801, %v961
        %972 = vst [vmem:[#allocation2] sm:$0xff] %v964
        %973 = vst [vmem:[#allocation2 + $0x8] sm:$0xff] %v965
        %974 = vst [vmem:[#allocation2 + $0x10] sm:$0xff] %v966
        %975 = vst [vmem:[#allocation2 + $0x18] sm:$0xff] %v967
        %976 = vst [vmem:[#allocation2 + $0x20] sm:$0xff] %v968
        %977 = vst [vmem:[#allocation2 + $0x28] sm:$0xff] %v969
        %978 = vst [vmem:[#allocation2 + $0x30] sm:$0xff] %v970
        %979 = vst [vmem:[#allocation2 + $0x38] sm:$0xff] %v971
        %v980 = vld [vmem:[#allocation2] sm:$0xff]
        %v981 = vld [vmem:[#allocation2 + $0x8] sm:$0xff]
        %v982 = vld [vmem:[#allocation2 + $0x10] sm:$0xff]
        %v983 = vld [vmem:[#allocation2 + $0x18] sm:$0xff]
        %v984 = vld [vmem:[#allocation2 + $0x20] sm:$0xff]
        %v985 = vld [vmem:[#allocation2 + $0x28] sm:$0xff]
        %v986 = vld [vmem:[#allocation2 + $0x30] sm:$0xff]
        %v987 = vld [vmem:[#allocation2 + $0x38] sm:$0xff]
        %v988 = vpack.c.bf16 %v981, %v980
        %v989 = vpack.c.bf16 %v983, %v982
        %v990 = vpack.c.bf16 %v985, %v984
        %v991 = vpack.c.bf16 %v987, %v986
        %v996 = vunpack.c.l.b16 %v988
        %v997 = vunpack.c.h.b16 %v988
        %v998 = vunpack.c.l.b16 %v989
        %v999 = vunpack.c.h.b16 %v989
        %v1000 = vunpack.c.l.b16 %v990
        %v1001 = vunpack.c.h.b16 %v990
        %v1002 = vunpack.c.l.b16 %v991
        %v1003 = vunpack.c.h.b16 %v991
        %v1004 = vpack.c.b16 %v996, %v996
        %v1005 = vpack.c.b16 %v997, %v997
        %v1006 = vpack.c.b16 %v998, %v998
        %v1007 = vpack.c.b16 %v999, %v999
        %v1008 = vpack.c.b16 %v1000, %v1000
        %v1009 = vpack.c.b16 %v1001, %v1001
        %v1010 = vpack.c.b16 %v1002, %v1002
        %v1011 = vpack.c.b16 %v1003, %v1003
        %1020 = vst [vmem:[%s235] sm:$0xf] %v1004
        %1021 = vst [vmem:[%s235 + $0x4] sm:$0xf] %v1005
        %1022 = vst [vmem:[%s235 + $0x8] sm:$0xf] %v1006
        %1023 = vst [vmem:[%s235 + $0xc] sm:$0xf] %v1007
        %1024 = vst [vmem:[%s235 + $0x10] sm:$0xf] %v1008
        %1025 = vst [vmem:[%s235 + $0x14] sm:$0xf] %v1009
        %1026 = vst [vmem:[%s235 + $0x18] sm:$0xf] %v1010
        %1027 = vst [vmem:[%s235 + $0x1c] sm:$0xf] %v1011
        %v1028 = vadd.f32 %v980, %v981
        %v1029 = vadd.f32 %v1028, %v982
        %v1030 = vadd.f32 %v1029, %v983
        %v1031 = vadd.f32 %v1030, %v984
        %v1032 = vadd.f32 %v1031, %v985
        %v1033 = vadd.f32 %v1032, %v986
        %v1034 = vadd.f32 %v1033, %v987
        %v1035 = vrot.slane %v1034, 4
        %v1036 = vadd.f32 %v1034, %v1035
        %v1037 = vrot.slane %v1036, 2
        %v1038 = vadd.f32 %v1036, %v1037
        %v1039 = vrot.slane %v1038, 1
        %v1040 = vadd.f32 %v1038, %v1039
        %v1041 = vmul.f32 %v980, %v980
        %v1042 = vmul.f32 %v981, %v981
        %v1043 = vmul.f32 %v982, %v982
        %v1044 = vmul.f32 %v983, %v983
        %v1045 = vmul.f32 %v984, %v984
        %v1046 = vmul.f32 %v985, %v985
        %v1047 = vmul.f32 %v986, %v986
        %v1048 = vmul.f32 %v987, %v987
        %v1049 = vadd.f32 %v1041, %v1042
        %v1050 = vadd.f32 %v1049, %v1043
        %v1051 = vadd.f32 %v1050, %v1044
        %v1052 = vadd.f32 %v1051, %v1045
        %v1053 = vadd.f32 %v1052, %v1046
        %v1054 = vadd.f32 %v1053, %v1047
        %v1055 = vadd.f32 %v1054, %v1048
        %v1056 = vrot.slane %v1055, 4
        %v1057 = vadd.f32 %v1055, %v1056
        %v1058 = vrot.slane %v1057, 2
        %v1059 = vadd.f32 %v1057, %v1058
        %v1060 = vrot.slane %v1059, 1
        %v1061 = vadd.f32 %v1059, %v1060
        %1062 = vst [vmem:[%s242] sm:$0xff] %v1040
        %1063 = vst [vmem:[%s249] sm:$0xff] %v1061
        %s1064 = sand.u32 %s81, 1
        %s1065 = scalar_lea.sflag [#allocation5], %s1064
        %s1066 = sand.u32 %s81, 1
        %s1067 = smul.addr %s1066, 32
        %s1068 = scalar_lea.vmem [#allocation8], %s1067
        %s1069 = sand.u32 %s26, 1
        %s1070 = scalar_lea.sflag [#allocation10], %s1069
        %s1071 = sand.u32 %s107, 1
        %s1072 = smul.addr %s1071, 8
        %s1073 = scalar_lea.vmem [#allocation9], %s1072
        %s1074 = sand.u32 %s26, 1
        %s1075 = scalar_lea.sflag [#allocation10], %s1074
        %s1076 = sand.u32 %s133, 1
        %s1077 = smul.addr %s1076, 8
        %s1078 = scalar_lea.vmem [#allocation11], %s1077
        // Predicated region
        $region37: #{tpu_custom_call.1} parent=27 // pred_check
          %p1079 = pneg %p91
        $region38: #{tpu_custom_call.1} parent=27 // pred_check_branch
          %1081 = sbr.rel (%p1079) target = $region40
        $region39: #{tpu_custom_call.1} parent=27 // pred_region
          %s1083 = ssub.s32 512, 512
          %1084 = vsyncadd %s1065, %s1083
          %s1085 = smul.addr %s26, 8
          %s1086 = smul.addr %s1085, 64
          %s1087 = scalar_lea.hbm %s2, %s1086
          %s1088 = sshll.u32 %s1068, 4
          %s1089 = int_to_ptr.vmem [resolvable:$true] %s1088
          %1094 = dma.vmem_to_hbm [thread:$0]  %s1089, 512, %s1087, %s1065, 64, 64, 4
        $region40: #{tpu_custom_call.1} parent=27 // pred_fallthru
          _
        // Predicated region
        $region41: #{tpu_custom_call.1} parent=27 // pred_check
          %p1095 = pneg %p117
        $region42: #{tpu_custom_call.1} parent=27 // pred_check_branch
          %1097 = sbr.rel (%p1095) target = $region44
        $region43: #{tpu_custom_call.1} parent=27 // pred_region
          %s1099 = ssub.s32 128, 128
          %1100 = vsyncadd %s1070, %s1099
          %s1101 = smul.addr %s26, 128
          %s1102 = scalar_lea.hbm %s3, %s1101
          %s1104 = sshll.u32 %s1073, 4
          %s1105 = int_to_ptr.vmem [resolvable:$true] %s1104
          %1107 = dma.vmem_to_hbm [thread:$0]  %s1105, 128, %s1102, %s1070
        $region44: #{tpu_custom_call.1} parent=27 // pred_fallthru
          _
        // Predicated region
        $region45: #{tpu_custom_call.1} parent=27 // pred_check
          %p1108 = pneg %p143
        $region46: #{tpu_custom_call.1} parent=27 // pred_check_branch
          %1110 = sbr.rel (%p1108) target = $region48
        $region47: #{tpu_custom_call.1} parent=27 // pred_region
          %s1112 = ssub.s32 128, 128
          %1113 = vsyncadd %s1075, %s1112
          %s1114 = smul.addr %s26, 128
          %s1115 = scalar_lea.hbm %s4, %s1114
          %s1117 = sshll.u32 %s1078, 4
          %s1118 = int_to_ptr.vmem [resolvable:$true] %s1117
          %1120 = dma.vmem_to_hbm [thread:$0]  %s1118, 128, %s1115, %s1075
        $region48: #{tpu_custom_call.1} parent=27 // pred_fallthru
          _
      $region28: #{tpu_custom_call.1} parent=5 // pred_fallthru
        _
      %p1121 = scmp.le.s32.totalorder 2, %s21
      // Predicated region
      $region49: #{tpu_custom_call.1} parent=5 // pred_check
        %p1122 = pneg %p1121
      $region50: #{tpu_custom_call.1} parent=5 // pred_check_branch
        %1124 = sbr.rel (%p1122) target = $region52
      $region51: #{tpu_custom_call.1} parent=5 // pred_region
        %s1125 = ssub.s32 %s21, 2
        // Predicated region
        $region53: #{tpu_custom_call.1} parent=51 // pred_check
          %p1126 = pneg %p97
        $region54: #{tpu_custom_call.1} parent=51 // pred_check_branch
          %1128 = sbr.rel (%p1126) target = $region56
        $region55: #{tpu_custom_call.1} parent=51 // pred_region
          %s1129 = sand.u32 %s82, 1
          %s1130 = scalar_lea.sflag [#allocation5], %s1129
          %s1131 = sand.u32 %s82, 1
          %s1132 = smul.addr %s1131, 32
          %s1133 = scalar_lea.vmem [#allocation8], %s1132
          %1134 = dma.done %s1130, 512
        $region56: #{tpu_custom_call.1} parent=51 // pred_fallthru
          _
        // Predicated region
        $region57: #{tpu_custom_call.1} parent=51 // pred_check
          %p1135 = pneg %p123
        $region58: #{tpu_custom_call.1} parent=51 // pred_check_branch
          %1137 = sbr.rel (%p1135) target = $region60
        $region59: #{tpu_custom_call.1} parent=51 // pred_region
          %s1138 = sand.u32 %s27, 1
          %s1139 = scalar_lea.sflag [#allocation10], %s1138
          %s1140 = sand.u32 %s108, 1
          %s1141 = smul.addr %s1140, 8
          %s1142 = scalar_lea.vmem [#allocation9], %s1141
          %1143 = dma.done %s1139, 128
        $region60: #{tpu_custom_call.1} parent=51 // pred_fallthru
          _
        // Predicated region
        $region61: #{tpu_custom_call.1} parent=51 // pred_check
          %p1144 = pneg %p149
        $region62: #{tpu_custom_call.1} parent=51 // pred_check_branch
          %1146 = sbr.rel (%p1144) target = $region64
        $region63: #{tpu_custom_call.1} parent=51 // pred_region
          %s1147 = sand.u32 %s27, 1
          %s1148 = scalar_lea.sflag [#allocation10], %s1147
          %s1149 = sand.u32 %s134, 1
          %s1150 = smul.addr %s1149, 8
          %s1151 = scalar_lea.vmem [#allocation11], %s1150
          %1152 = dma.done %s1148, 128
        $region64: #{tpu_custom_call.1} parent=51 // pred_fallthru
          _
      $region52: #{tpu_custom_call.1} parent=5 // pred_fallthru
        _
    $region6: #{tpu_custom_call.1} parent=1 // loop_footer
      %s25 = sadd.s32 1, %s21
    $region7: #{tpu_custom_call.1} parent=1 // loop_footer_branch
      %20 = sbr.rel target = $region3
    $region8: #{tpu_custom_call.1} parent=1 // loop_exit
      _
    %1153 = vsyncpa [#allocation4], 1
    %s1154 = scalar_lea.sflag [#allocation4], 1
    %1155 = vsyncpa %s1154, 1
    %1156 = vsyncpa [#allocation7], 1
    %1157 = vsyncpa [#allocation5], 1
    %s1158 = scalar_lea.sflag [#allocation5], 1
    %1159 = vsyncpa %s1158, 1
    %1160 = vsyncpa [#allocation10], 1
    %s1161 = scalar_lea.sflag [#allocation10], 1
    %1162 = vsyncpa %s1161, 1

</llo_original>
